<compile_context>
chip_gen: v5e
topology: v5e:2x2
jax: 0.10.0
libtpu: 0.0.40
codegen_flags: <defaults>
</compile_context>

<pallas_src>
import jax
import jax.numpy as jnp
import numpy as np
from jax.experimental import pallas as pl
from jax.experimental.pallas import tpu as pltpu

LANE = 128
_MAX_TILE_ELEMS = 2 ** 21   # ~8 MiB f32 / 4 MiB bf16 per output tile


def _round_up(n, m):
    return ((n + m - 1) // m) * m


def _pick_tiles(np_):
    """Pick (TM, TN) dividing the padded size Np.

    TN = full extent when moderate (lane-dense full-row output block; the x1
    row tile + clamp bound stay resident and the j axis degenerates to 1),
    otherwise the largest 128-multiple divisor.  TM is the largest divisor of
    Np keeping the (TM, TN) f32 tile <= ~8 MiB, which amortizes the ~0.35 us
    per-grid-step overhead (important on v7x) without pressuring VMEM.
    """
    if np_ <= 8192:
        tn = np_
    else:
        tn = max(t for t in (4096, 2048, 1024, 512, 256, 128) if np_ % t == 0)
    tm = 128
    for t in sorted({np_, 4096, 2048, 1024, 512, 384, 256, 128}, reverse=True):
        if t <= np_ and np_ % t == 0 and t * tn <= _MAX_TILE_ELEMS:
            tm = t
            break
    return tm, tn


def _gibbs_tile_kernel(x1a_ref, x2at_ref, logc_ref, out_ref):
    """One (TM, TN) covariance tile for one batch element.

    The wrapper augments the features so a single MXU pass yields
      expo = x1s_i . x2s_j + (log c_i - 0.5||x1s_i||^2) + (-0.5||x2s_j||^2)
    leaving only a clamp (VPU min) and an exp (EUP) per output element.
    """
    expo = jax.lax.dot_general(
        x1a_ref[0], x2at_ref[0],
        dimension_numbers=(((1,), (0,)), ((), ())),
        preferred_element_type=jnp.float32)              # (TM, TN), f32 on the MXU
    expo = jnp.minimum(expo, logc_ref[0])                # == gpytorch's max(sq_dist, 0) clamp
    if out_ref.dtype == jnp.bfloat16:
        # bf16 exp hits the bf16 EUP path on v6e/v7x (crit path once stores
        # shrink); on v5e it is widened to f32 (neutral, still correct).
        out_ref[0] = jnp.exp(expo.astype(jnp.bfloat16))
    else:
        out_ref[0] = jnp.exp(expo).astype(out_ref.dtype)


def gibbs_covariance_pallas(x1, x2, l1, l2, out_dtype=jnp.bfloat16, trim_padding=True):
    """x1, x2: (B, N, D); l1, l2: (B, N, 1) -> covariance (B, N, N).

    out_dtype defaults to bfloat16 (halves the dominant N^2 HBM writeback);
    pass out_dtype=jnp.float32 for exact module dtype semantics.
    If trim_padding=False and N is not a multiple of 128, the padded
    (B, Np, Np) array is returned (rows/cols >= N hold finite garbage), which
    skips the post-kernel strided-slice copy.
    """
    B, N, D = x1.shape
    assert x2.shape == (B, N, D) and l1.shape == (B, N, 1) and l2.shape == (B, N, 1)

    f32 = jnp.float32
    x1 = x1.astype(f32)
    x2 = x2.astype(f32)
    l1 = l1.astype(f32)
    l2 = l2.astype(f32)

    # --- Per-row precompute (O(N*D), negligible vs the O(N^2) tile work) -----
    inv_ls = jax.lax.rsqrt(l1 * l1 + l2 * l2)                   # 1 / L (per-row, as torch broadcasts)
    log_const = 0.5 * jnp.log(2.0 * l1 * l2 * inv_ls * inv_ls)  # log sqrt(2 l1 l2 / L^2)
    x1s = x1 * inv_ls                                           # x1 / L
    x2s = x2 * inv_ls                                           # x2 / L
    row_term = log_const - 0.5 * jnp.sum(x1s * x1s, -1, keepdims=True)   # (B, N, 1)
    col_term = -0.5 * jnp.sum(x2s * x2s, -1, keepdims=True)              # (B, N, 1)
    ones = jnp.ones_like(row_term)
    # Augmented features fold the broadcast adds into the MXU pass:
    #   [x1s | row_term | 1] . [x2s | 1 | col_term]^T = cross + row_term_i + col_term_j
    x1a = jnp.concatenate([x1s, row_term, ones], axis=-1)       # (B, N, D+2)
    x2a = jnp.concatenate([x2s, ones, col_term], axis=-1)       # (B, N, D+2)

    # Pad features to a sublane multiple (zeros add nothing to the dot) and N
    # to a lane multiple so every output tile is an unmasked, lane-dense store.
    Dp = _round_up(D + 2, 8)
    Np = _round_up(N, LANE)
    x1a = jnp.pad(x1a, ((0, 0), (0, Np - N), (0, Dp - (D + 2))))
    x2a = jnp.pad(x2a, ((0, 0), (0, Np - N), (0, Dp - (D + 2))))
    logc = jnp.pad(log_const, ((0, 0), (0, Np - N), (0, 0)))
    # Pre-transpose the RHS: (Dp, TN) tiles are lane-dense along TN and already
    # in MXU RHS orientation (cheap DMA, no per-tile relayout).
    x2at = jnp.swapaxes(x2a, 1, 2)                              # (B, Dp, Np)

    TM, TN = _pick_tiles(Np)
    # Column-tile index innermost: the x1 row block and the clamp bound keep
    # the same block index across consecutive j steps, so Pallas skips their
    # re-DMA.
    grid = (B, Np // TM, Np // TN)

    out_itemsize = np.dtype(out_dtype).itemsize
    cost = pl.CostEstimate(
        flops=2 * B * Np * Np * Dp,
        transcendentals=B * Np * Np,
        bytes_accessed=B * Np * Np * out_itemsize + (2 * B * Np * Dp + B * Np) * 4)

    out = pl.pallas_call(
        _gibbs_tile_kernel,
        out_shape=jax.ShapeDtypeStruct((B, Np, Np), out_dtype),
        grid=grid,
        in_specs=[
            pl.BlockSpec((1, TM, Dp), lambda b, i, j: (b, i, 0)),   # x1 rows (resident over j)
            pl.BlockSpec((1, Dp, TN), lambda b, i, j: (b, 0, j)),   # x2 cols, pre-transposed
            pl.BlockSpec((1, TM, 1), lambda b, i, j: (b, i, 0)),    # per-row clamp bound (log const)
        ],
        out_specs=pl.BlockSpec((1, TM, TN), lambda b, i, j: (b, i, j)),
        compiler_params=pltpu.CompilerParams(
            dimension_semantics=("parallel", "parallel", "parallel"),
            vmem_limit_bytes=48 << 20),
        cost_estimate=cost,
    )(x1a, x2at, logc)

    if trim_padding and Np != N:
        out = out[:, :N, :N]
    return out


def make_lengthscale_fn(key, d):
    """Deterministic synthetic lengthscale_fn: x -> 0.1 + softplus(x @ w)."""
    w = 0.5 * jax.random.normal(key, (d, 1), dtype=jnp.float32)

    def fn(x):
        return 0.1 + jax.nn.softplus(x @ w)   # (..., N, 1), strictly positive

    return fn


def gibbs_forward(lengthscale_fn, x1, x2, out_dtype=jnp.bfloat16):
    # The arbitrary lengthscale_fn Callable stays in plain JAX glue, as in the
    # torch module (it is an opaque nn.Module there).
    l1 = lengthscale_fn(x1)
    l2 = lengthscale_fn(x2)
    return gibbs_covariance_pallas(x1, x2, l1, l2, out_dtype=out_dtype)


def gibbs_reference(lengthscale_fn, x1, x2):
    """Pure-JAX mirror of the torch forward (full-covariance branch)."""
    l1 = lengthscale_fn(x1)
    l2 = lengthscale_fn(x2)
    ls = jnp.sqrt(l1 ** 2 + l2 ** 2)
    const = jnp.sqrt(2.0 * l1 * l2 / ls ** 2)
    x1_ = x1 / ls
    x2_ = x2 / ls
    sq = jnp.sum((x1_[:, :, None, :] - x2_[:, None, :, :]) ** 2, axis=-1)
    return const * jnp.exp(-0.5 * sq)


if __name__ == "__main__":
    key = jax.random.PRNGKey(0)
    k_w, k_x1, k_x2, k_y1, k_y2 = jax.random.split(key, 5)

    D = 8
    lengthscale_fn = make_lengthscale_fn(k_w, D)

    # Small shape: single lane-padded tile; exercises the trim path.
    B, N = 2, 16
    x1 = jax.random.normal(k_x1, (B, N, D), dtype=jnp.float32)
    x2 = jax.random.normal(k_x2, (B, N, D), dtype=jnp.float32)
    ref = gibbs_reference(lengthscale_fn, x1, x2)

    out_f32 = jax.block_until_ready(
        gibbs_forward(lengthscale_fn, x1, x2, out_dtype=jnp.float32))
    np.testing.assert_allclose(np.asarray(out_f32), np.asarray(ref),
                               rtol=2e-3, atol=1e-5)

    out_bf16 = jax.block_until_ready(gibbs_forward(lengthscale_fn, x1, x2))
    np.testing.assert_allclose(np.asarray(out_bf16.astype(jnp.float32)),
                               np.asarray(ref), rtol=2e-2, atol=8e-3)

    # Larger shape: no padding, full-extent (384, 384) tile per batch element.
    B2, N2 = 2, 384
    y1 = jax.random.normal(k_y1, (B2, N2, D), dtype=jnp.float32)
    y2 = jax.random.normal(k_y2, (B2, N2, D), dtype=jnp.float32)
    ref2 = gibbs_reference(lengthscale_fn, y1, y2)

    out2_f32 = jax.block_until_ready(
        gibbs_forward(lengthscale_fn, y1, y2, out_dtype=jnp.float32))
    np.testing.assert_allclose(np.asarray(out2_f32), np.asarray(ref2),
                               rtol=2e-3, atol=1e-5)

    out2_bf16 = jax.block_until_ready(gibbs_forward(lengthscale_fn, y1, y2))
    np.testing.assert_allclose(np.asarray(out2_bf16.astype(jnp.float32)),
                               np.asarray(ref2), rtol=2e-2, atol=8e-3)

    print("KERNEL_OK")
</pallas_src>

<mosaic_0001>
module attributes {stable_mosaic.version = 11 : i64} {
  func.func @_gibbs_tile_kernel(%arg0: i32, %arg1: i32, %arg2: i32, %arg3: memref<1x128x16xf32, #tpu.memory_space<vmem>>, %arg4: memref<1x16x128xf32, #tpu.memory_space<vmem>>, %arg5: memref<1x128x1xf32, #tpu.memory_space<vmem>>, %arg6: memref<1x128x128xf32, #tpu.memory_space<vmem>>) attributes {dimension_semantics = [#tpu.dimension_semantics<parallel>, #tpu.dimension_semantics<parallel>, #tpu.dimension_semantics<parallel>], iteration_bounds = array<i64: 2, 1, 1>, scalar_prefetch = 0 : i64, scratch_operands = 0 : i64, tpu.core_type = #tpu.core_type<tc>, window_params = [{transform_indices = @transform_0, window_bounds = array<i64: 1, 128, 16>}, {transform_indices = @transform_1, window_bounds = array<i64: 1, 16, 128>}, {transform_indices = @transform_2, window_bounds = array<i64: 1, 128, 1>}, {transform_indices = @transform_3, window_bounds = array<i64: 1, 128, 128>}]} {
    %c0 = arith.constant 0 : index
    %c0_0 = arith.constant 0 : index
    %c0_1 = arith.constant 0 : index
    %0 = vector.load %arg3[%c0, %c0_0, %c0_1] : memref<1x128x16xf32, #tpu.memory_space<vmem>>, vector<1x128x16xf32>
    %1 = vector.shape_cast %0 : vector<1x128x16xf32> to vector<128x16xf32>
    %c0_2 = arith.constant 0 : index
    %c0_3 = arith.constant 0 : index
    %c0_4 = arith.constant 0 : index
    %2 = vector.load %arg4[%c0_2, %c0_3, %c0_4] : memref<1x16x128xf32, #tpu.memory_space<vmem>>, vector<1x16x128xf32>
    %3 = vector.shape_cast %2 : vector<1x16x128xf32> to vector<16x128xf32>
    %cst = arith.constant dense<0.000000e+00> : vector<128x128xf32>
    %4 = tpu.matmul %1, %3, %cst {dimension_numbers = #tpu.dot_dimension_numbers<[1], [0], [0], [1], [0, 0, 1, 1], [], []>} : vector<128x16xf32>, vector<16x128xf32>, vector<128x128xf32> -> vector<128x128xf32>
    %c0_5 = arith.constant 0 : index
    %c0_6 = arith.constant 0 : index
    %c0_7 = arith.constant 0 : index
    %5 = vector.load %arg5[%c0_5, %c0_6, %c0_7] : memref<1x128x1xf32, #tpu.memory_space<vmem>>, vector<1x128x1xf32>
    %6 = vector.shape_cast %5 : vector<1x128x1xf32> to vector<128x1xf32>
    %7 = vector.broadcast %6 : vector<128x1xf32> to vector<128x128xf32>
    %8 = arith.minimumf %4, %7 : vector<128x128xf32>
    %9 = math.exp %8 : vector<128x128xf32>
    %c0_8 = arith.constant 0 : index
    %c0_9 = arith.constant 0 : index
    %c0_10 = arith.constant 0 : index
    %10 = vector.load %arg6[%c0_8, %c0_9, %c0_10] : memref<1x128x128xf32, #tpu.memory_space<vmem>>, vector<1x128x128xf32>
    %11 = vector.shape_cast %10 : vector<1x128x128xf32> to vector<128x128xf32>
    %12 = vector.shape_cast %9 : vector<128x128xf32> to vector<1x128x128xf32>
    tpu.vector_store %arg6[%c0_8, %c0_9, %c0_10], %12 {strides = array<i32>} : memref<1x128x128xf32, #tpu.memory_space<vmem>>, vector<1x128x128xf32>,
    return
  }
  func.func @transform_0(%arg0: i32, %arg1: i32, %arg2: i32) -> (i32, i32, i32) {
    %c0_i32 = arith.constant 0 : i32
    %c0_i32_0 = arith.constant 0 : i32
    return %arg0, %arg1, %c0_i32 : i32, i32, i32
  }
  func.func @transform_1(%arg0: i32, %arg1: i32, %arg2: i32) -> (i32, i32, i32) {
    %c0_i32 = arith.constant 0 : i32
    %c0_i32_0 = arith.constant 0 : i32
    return %arg0, %c0_i32, %arg2 : i32, i32, i32
  }
  func.func @transform_2(%arg0: i32, %arg1: i32, %arg2: i32) -> (i32, i32, i32) {
    %c0_i32 = arith.constant 0 : i32
    %c0_i32_0 = arith.constant 0 : i32
    return %arg0, %arg1, %c0_i32 : i32, i32, i32
  }
  func.func @transform_3(%arg0: i32, %arg1: i32, %arg2: i32) -> (i32, i32, i32) {
    %c0_i32 = arith.constant 0 : i32
    return %arg0, %arg1, %arg2 : i32, i32, i32
  }
}

</mosaic_0001>

<llo_original>
// kernel: tpu_custom_call.1
$region0: #{tpu_custom_call.1}
  #allocation0 [shape = 'u32[]', space=smem, size = 0x4, offset = 0x4, fixed_abs, tag = 'smem constant byte address 0x4 - core index']
  #allocation1 [shape = 'u32[72,128]{1,0:T(1,128)}', space=vmem, size = 0x9000, scoped, tag = 'internal scratch']
  %s0 = inlined_call_operand.vmem [shape: f32[2,128,16], index: 0, kind: input, shape index: {}]
  %s1 = inlined_call_operand.vmem [shape: f32[2,16,128], index: 1, kind: input, shape index: {}]
  %s2 = inlined_call_operand.vmem [shape: f32[2,128,1], index: 2, kind: input, shape index: {}]
  %s3 = inlined_call_operand.hbm [shape: f32[2,128,128], index: 3, kind: output, shape index: {}]
  %s4 = sld [smem:[#allocation0]]
  $region45: #{tpu_custom_call.1} parent=0
    _
  %s6 = ssub.s32 1, %s4
  %s7 = scalar_select 0, %s6, %s4
  $region1: #{tpu_custom_call.1} parent=0
    #allocation2 [shape = 'u8[131072]{0}', space=vmem, size = 0x20000, scoped, tag = 'output window, operand 0']
    #allocation3 [shape = 's32[2]{0}', space=sflag, size = 0x8, scoped, tag = 'scoped memory for tpu_custom_call.1']
    %8 = vsyncpa [#allocation3], 0
    %s9 = scalar_lea.sflag [#allocation3], 1
    %10 = vsyncpa %s9, 0
    loop: start=0, step=1, limit=4
    $region2: #{tpu_custom_call.1} parent=1 // loop_pre_header
      _
    $region3: #{tpu_custom_call.1} parent=1 // loop_header
      %s12 = sphi 0, %s16
      %p13 = scmp.ge.s32.totalorder %s12, 4
      %s19 = sphi 0, %s38
      %s20 = sphi 0, %s34
      %s21 = sphi 0, %s30
      %s22 = sphi 0, %s19
      %s23 = sphi 0, %s20
      %s24 = sphi 0, %s21
      %s25 = sphi 0, %s22
      %s26 = sphi 0, %s23
      %s27 = sphi 0, %s24
      %s43 = sphi 0, %s45
      %s46 = sphi 0, %s43
      %s47 = sphi 0, %s46
      %s63 = sphi 0, %s47
      %s71 = sphi 0, %s73
      %s74 = sphi 0, %s71
      %s75 = sphi 0, %s74
      %s91 = sphi 0, %s75
      %s99 = sphi 0, %s101
      %s102 = sphi 0, %s99
      %s103 = sphi 0, %s102
      %s119 = sphi 0, %s103
      %s129 = sphi 0, %s131
      %s132 = sphi 0, %s129
      %s133 = sphi 0, %s132
      %s149 = sphi 0, %s133
    $region4: #{tpu_custom_call.1} parent=1 // loop_header_branch
      %15 = sbr.rel (%p13) target = $region8
    $region5: #{tpu_custom_call.1} parent=1 // loop_body
      %s17 = ssub.s32 %s12, 1
      %s18 = ssub.s32 %s12, 2
      %s28 = sadd.s32 1, %s21
      %p29 = scmp.ge.s32.totalorder %s28, 1
      %s30 = scalar_select %p29, 0, %s28
      %s31 = sadd.s32 1, %s20
      %s32 = scalar_select %p29, %s31, %s20
      %p33 = scmp.ge.s32.totalorder %s32, 1
      %s34 = scalar_select %p33, 0, %s32
      %s35 = sadd.s32 1, %s19
      %s36 = scalar_select %p33, %s35, %s19
      %p37 = scmp.ge.s32.totalorder %s36, 2
      %s38 = scalar_select %p37, 0, %s36
      %s39 = ssub.s32 %s19, %s38
      %s40 = ssub.s32 %s20, %s34
      %s41 = sor.u32 %s39, %s40
      %p42 = scmp.eq.s32.totalorder %s41, 0
      %s44 = sadd.s32 %s43, 1
      %s45 = scalar_select %p42, %s43, %s44
      %p48 = pneg %p42
      %p49 = scmp.eq.s32.totalorder %s12, 1
      %p50 = por %p48, %p49
      %p51 = scmp.ne.s32.totalorder %s43, %s46
      %p52 = scmp.eq.s32.totalorder %s12, 0
      %p53 = por %p51, %p52
      %p54 = scmp.ne.s32.totalorder %s43, %s46
      %p55 = scmp.eq.s32.totalorder %s17, 1
      %p56 = por %p54, %p55
      %p57 = scmp.ne.s32.totalorder %s46, %s47
      %p58 = scmp.eq.s32.totalorder %s17, 0
      %p59 = por %p57, %p58
      %p60 = scmp.ne.s32.totalorder %s46, %s47
      %p61 = scmp.eq.s32.totalorder %s18, 1
      %p62 = por %p60, %p61
      %p64 = scmp.ne.s32.totalorder %s47, %s63
      %p65 = scmp.eq.s32.totalorder %s18, 0
      %p66 = por %p64, %p65
      %s67 = ssub.s32 %s19, %s38
      %s68 = ssub.s32 %s21, %s30
      %s69 = sor.u32 %s67, %s68
      %p70 = scmp.eq.s32.totalorder %s69, 0
      %s72 = sadd.s32 %s71, 1
      %s73 = scalar_select %p70, %s71, %s72
      %p76 = pneg %p70
      %p77 = scmp.eq.s32.totalorder %s12, 1
      %p78 = por %p76, %p77
      %p79 = scmp.ne.s32.totalorder %s71, %s74
      %p80 = scmp.eq.s32.totalorder %s12, 0
      %p81 = por %p79, %p80
      %p82 = scmp.ne.s32.totalorder %s71, %s74
      %p83 = scmp.eq.s32.totalorder %s17, 1
      %p84 = por %p82, %p83
      %p85 = scmp.ne.s32.totalorder %s74, %s75
      %p86 = scmp.eq.s32.totalorder %s17, 0
      %p87 = por %p85, %p86
      %p88 = scmp.ne.s32.totalorder %s74, %s75
      %p89 = scmp.eq.s32.totalorder %s18, 1
      %p90 = por %p88, %p89
      %p92 = scmp.ne.s32.totalorder %s75, %s91
      %p93 = scmp.eq.s32.totalorder %s18, 0
      %p94 = por %p92, %p93
      %s95 = ssub.s32 %s19, %s38
      %s96 = ssub.s32 %s20, %s34
      %s97 = sor.u32 %s95, %s96
      %p98 = scmp.eq.s32.totalorder %s97, 0
      %s100 = sadd.s32 %s99, 1
      %s101 = scalar_select %p98, %s99, %s100
      %p104 = pneg %p98
      %p105 = scmp.eq.s32.totalorder %s12, 1
      %p106 = por %p104, %p105
      %p107 = scmp.ne.s32.totalorder %s99, %s102
      %p108 = scmp.eq.s32.totalorder %s12, 0
      %p109 = por %p107, %p108
      %p110 = scmp.ne.s32.totalorder %s99, %s102
      %p111 = scmp.eq.s32.totalorder %s17, 1
      %p112 = por %p110, %p111
      %p113 = scmp.ne.s32.totalorder %s102, %s103
      %p114 = scmp.eq.s32.totalorder %s17, 0
      %p115 = por %p113, %p114
      %p116 = scmp.ne.s32.totalorder %s102, %s103
      %p117 = scmp.eq.s32.totalorder %s18, 1
      %p118 = por %p116, %p117
      %p120 = scmp.ne.s32.totalorder %s103, %s119
      %p121 = scmp.eq.s32.totalorder %s18, 0
      %p122 = por %p120, %p121
      %s123 = ssub.s32 %s19, %s38
      %s124 = ssub.s32 %s20, %s34
      %s125 = sor.u32 %s123, %s124
      %s126 = ssub.s32 %s21, %s30
      %s127 = sor.u32 %s125, %s126
      %p128 = scmp.eq.s32.totalorder %s127, 0
      %s130 = sadd.s32 %s129, 1
      %s131 = scalar_select %p128, %s129, %s130
      %p134 = pneg %p128
      %p135 = scmp.eq.s32.totalorder %s12, 1
      %p136 = por %p134, %p135
      %p137 = scmp.ne.s32.totalorder %s129, %s132
      %p138 = scmp.eq.s32.totalorder %s12, 0
      %p139 = por %p137, %p138
      %p140 = scmp.ne.s32.totalorder %s129, %s132
      %p141 = scmp.eq.s32.totalorder %s17, 1
      %p142 = por %p140, %p141
      %p143 = scmp.ne.s32.totalorder %s132, %s133
      %p144 = scmp.eq.s32.totalorder %s17, 0
      %p145 = por %p143, %p144
      %p146 = scmp.ne.s32.totalorder %s132, %s133
      %p147 = scmp.eq.s32.totalorder %s18, 1
      %p148 = por %p146, %p147
      %p150 = scmp.ne.s32.totalorder %s133, %s149
      %p151 = scmp.eq.s32.totalorder %s18, 0
      %p152 = por %p150, %p151
      %p153 = scmp.le.s32.totalorder 1, %s12
      %p154 = scmp.lt.s32.totalorder %s12, 3
      %p155 = pnand %p153, %p154
      %p156 = pneg %p155
      // Predicated region
      $region9: #{tpu_custom_call.1} parent=5 // pred_check
        _
      $region10: #{tpu_custom_call.1} parent=5 // pred_check_branch
        %158 = sbr.rel (%p155) target = $region12
      $region11: #{tpu_custom_call.1} parent=5 // pred_region
        %s159 = ssub.s32 %s12, 1
      $region12: #{tpu_custom_call.1} parent=5 // pred_fallthru
        _
      %p160 = scmp.lt.s32.totalorder %s12, 2
      // Predicated region
      $region13: #{tpu_custom_call.1} parent=5 // pred_check
        %p161 = pneg %p160
      $region14: #{tpu_custom_call.1} parent=5 // pred_check_branch
        %163 = sbr.rel (%p161) target = $region16
      $region15: #{tpu_custom_call.1} parent=5 // pred_region
        // Predicated region
        $region17: #{tpu_custom_call.1} parent=15 // pred_check
          %p164 = pneg %p53
        $region18: #{tpu_custom_call.1} parent=15 // pred_check_branch
          %166 = sbr.rel (%p164) target = $region20
        $region19: #{tpu_custom_call.1} parent=15 // pred_region
          %s167 = smul.u32 16, %s20
          %p168 = scmp.lt.s32.totalorder %s19, 1
          %s169 = scalar_select %p168, %s19, 1
          %p170 = scmp.lt.s32.totalorder %s167, 15
          %s171 = scalar_select %p170, %s167, 15
          %s172 = smul.addr %s169, 16
          %s173 = sadd.s32 %s171, %s172
          %s174 = smul.addr %s173, 8
          %s175 = scalar_lea.vmem %s0, %s174
          %s176 = smul.u32 16, %s20
        $region20: #{tpu_custom_call.1} parent=15 // pred_fallthru
          _
        // Predicated region
        $region21: #{tpu_custom_call.1} parent=15 // pred_check
          %p177 = pneg %p81
        $region22: #{tpu_custom_call.1} parent=15 // pred_check_branch
          %179 = sbr.rel (%p177) target = $region24
        $region23: #{tpu_custom_call.1} parent=15 // pred_region
          %p180 = scmp.lt.s32.totalorder %s19, 1
          %s181 = scalar_select %p180, %s19, 1
          %p182 = scmp.lt.s32.totalorder %s21, 0
          %s183 = scalar_select %p182, %s21, 0
          %s184 = smul.addr %s181, 2
          %s185 = sadd.s32 %s183, %s184
          %s186 = smul.addr %s185, 8
          %s187 = scalar_lea.vmem %s1, %s186
        $region24: #{tpu_custom_call.1} parent=15 // pred_fallthru
          _
        // Predicated region
        $region25: #{tpu_custom_call.1} parent=15 // pred_check
          %p188 = pneg %p109
        $region26: #{tpu_custom_call.1} parent=15 // pred_check_branch
          %190 = sbr.rel (%p188) target = $region28
        $region27: #{tpu_custom_call.1} parent=15 // pred_region
          %s191 = smul.u32 16, %s20
          %p192 = scmp.lt.s32.totalorder %s19, 1
          %s193 = scalar_select %p192, %s19, 1
          %p194 = scmp.lt.s32.totalorder %s191, 15
          %s195 = scalar_select %p194, %s191, 15
          %s196 = smul.addr %s193, 16
          %s197 = sadd.s32 %s195, %s196
          %s198 = smul.addr %s197, 8
          %s199 = scalar_lea.vmem %s2, %s198
          %s200 = smul.u32 16, %s20
        $region28: #{tpu_custom_call.1} parent=15 // pred_fallthru
          _
      $region16: #{tpu_custom_call.1} parent=5 // pred_fallthru
        _
      %p201 = scmp.le.s32.totalorder 1, %s12
      %p202 = scmp.lt.s32.totalorder %s12, 3
      %p203 = pnand %p201, %p202
      %p204 = pneg %p203
      // Predicated region
      $region29: #{tpu_custom_call.1} parent=5 // pred_check
        _
      $region30: #{tpu_custom_call.1} parent=5 // pred_check_branch
        %206 = sbr.rel (%p203) target = $region32
      $region31: #{tpu_custom_call.1} parent=5 // pred_region
        %s207 = ssub.s32 %s12, 1
        %s208 = smul.u32 16, %s23
        %p209 = scmp.lt.s32.totalorder %s22, 1
        %s210 = scalar_select %p209, %s22, 1
        %p211 = scmp.lt.s32.totalorder %s208, 15
        %s212 = scalar_select %p211, %s208, 15
        %s213 = smul.addr %s210, 16
        %s214 = sadd.s32 %s212, %s213
        %s215 = smul.addr %s214, 8
        %s216 = scalar_lea.vmem %s0, %s215
        %p217 = pneg %p59
        %p218 = pneg %p56
        %p219 = scmp.lt.s32.totalorder %s22, 1
        %s220 = scalar_select %p219, %s22, 1
        %p221 = scmp.lt.s32.totalorder %s24, 0
        %s222 = scalar_select %p221, %s24, 0
        %s223 = smul.addr %s220, 2
        %s224 = sadd.s32 %s222, %s223
        %s225 = smul.addr %s224, 8
        %s226 = scalar_lea.vmem %s1, %s225
        %p227 = pneg %p87
        %p228 = pneg %p84
        %s229 = smul.u32 16, %s23
        %p230 = scmp.lt.s32.totalorder %s22, 1
        %s231 = scalar_select %p230, %s22, 1
        %p232 = scmp.lt.s32.totalorder %s229, 15
        %s233 = scalar_select %p232, %s229, 15
        %s234 = smul.addr %s231, 16
        %s235 = sadd.s32 %s233, %s234
        %s236 = smul.addr %s235, 8
        %s237 = scalar_lea.vmem %s2, %s236
        %p238 = pneg %p115
        %p239 = pneg %p112
        %p240 = pneg %p145
        %p241 = pneg %p142
        %s242 = sand.u32 %s132, 1
        %s243 = scalar_lea.sflag [#allocation3], %s242
        %s244 = sand.u32 %s132, 1
        %s245 = smul.addr %s244, 128
        %s246 = scalar_lea.vmem [#allocation2], %s245
        %s247 = smul.u32 16, %s23
        %p248 = scmp.lt.s32.totalorder %s22, 1
        %s249 = scalar_select %p248, %s22, 1
        %p250 = scmp.lt.s32.totalorder %s247, 15
        %s251 = scalar_select %p250, %s247, 15
        %s252 = smul.addr %s249, 16
        %s253 = sadd.s32 %s251, %s252
        %s254 = smul.addr %s253, 8
        %s255 = scalar_lea.vmem %s0, %s254
        %s256 = smul.u32 16, %s23
        %p257 = scmp.lt.s32.totalorder %s22, 1
        %s258 = scalar_select %p257, %s22, 1
        %p259 = scmp.lt.s32.totalorder %s24, 0
        %s260 = scalar_select %p259, %s24, 0
        %s261 = smul.addr %s258, 2
        %s262 = sadd.s32 %s260, %s261
        %s263 = smul.addr %s262, 8
        %s264 = scalar_lea.vmem %s1, %s263
        %s265 = smul.u32 16, %s23
        %p266 = scmp.lt.s32.totalorder %s22, 1
        %s267 = scalar_select %p266, %s22, 1
        %p268 = scmp.lt.s32.totalorder %s265, 15
        %s269 = scalar_select %p268, %s265, 15
        %s270 = smul.addr %s267, 16
        %s271 = sadd.s32 %s269, %s270
        %s272 = smul.addr %s271, 8
        %s273 = scalar_lea.vmem %s2, %s272
        %s274 = smul.u32 16, %s23
        %s275 = smul.u32 16, %s23
        %v276 = vld [vmem:[%s255] sm:$0xff]
        %v277 = vld [vmem:[%s255 + $0x8] sm:$0xff]
        %v278 = vld [vmem:[%s255 + $0x10] sm:$0xff]
        %v279 = vld [vmem:[%s255 + $0x18] sm:$0xff]
        %v280 = vld [vmem:[%s255 + $0x20] sm:$0xff]
        %v281 = vld [vmem:[%s255 + $0x28] sm:$0xff]
        %v282 = vld [vmem:[%s255 + $0x30] sm:$0xff]
        %v283 = vld [vmem:[%s255 + $0x38] sm:$0xff]
        %v284 = vld [vmem:[%s255 + $0x40] sm:$0xff]
        %v285 = vld [vmem:[%s255 + $0x48] sm:$0xff]
        %v286 = vld [vmem:[%s255 + $0x50] sm:$0xff]
        %v287 = vld [vmem:[%s255 + $0x58] sm:$0xff]
        %v288 = vld [vmem:[%s255 + $0x60] sm:$0xff]
        %v289 = vld [vmem:[%s255 + $0x68] sm:$0xff]
        %v290 = vld [vmem:[%s255 + $0x70] sm:$0xff]
        %v291 = vld [vmem:[%s255 + $0x78] sm:$0xff]
        %v292 = vld [vmem:[%s264] sm:$0xff]
        %v293 = vld [vmem:[%s264 + $0x8] sm:$0xff]
        %vm294 = vcmask 130048
        %v296 = vsel %vm294, %v276, 0
        %v299 = vsel %vm294, %v277, 0
        %v302 = vsel %vm294, %v278, 0
        %v305 = vsel %vm294, %v279, 0
        %v308 = vsel %vm294, %v280, 0
        %v311 = vsel %vm294, %v281, 0
        %v314 = vsel %vm294, %v282, 0
        %v317 = vsel %vm294, %v283, 0
        %v320 = vsel %vm294, %v284, 0
        %v323 = vsel %vm294, %v285, 0
        %v326 = vsel %vm294, %v286, 0
        %v329 = vsel %vm294, %v287, 0
        %v332 = vsel %vm294, %v288, 0
        %v335 = vsel %vm294, %v289, 0
        %v338 = vsel %vm294, %v290, 0
        %v341 = vsel %vm294, %v291, 0
        %343 = vmatpush.msra.mxu0 0.0
        %344 = vmatpush.msra.mxu0 0.0
        %345 = vmatpush.msra.mxu0 0.0
        %346 = vmatpush.msra.mxu0 0.0
        %347 = vmatpush.msra.mxu0 0.0
        %348 = vmatpush.msra.mxu0 0.0
        %349 = vmatpush.msra.mxu0 0.0
        %350 = vmatpush.msra.mxu0 0.0
        %351 = vmatpush.msra.mxu0 0.0
        %352 = vmatpush.msra.mxu0 0.0
        %353 = vmatpush.msra.mxu0 0.0
        %354 = vmatpush.msra.mxu0 0.0
        %355 = vmatpush.msra.mxu0 0.0
        %356 = vmatpush.msra.mxu0 0.0
        %357 = vmatpush.msra.mxu0 %v293
        %358 = vmatpush.msra.mxu0 %v292
        %359 = vmatmul.f32.gmra.mxu0 %v296
        %v360 = vpop.f32.mrf.mxu0
        %v361 = vadd.f32 0.0, %v360
        %362 = vmatmul.f32.gmra.mxu0 %v299
        %v363 = vpop.f32.mrf.mxu0
        %v364 = vadd.f32 0.0, %v363
        %365 = vmatmul.f32.gmra.mxu0 %v302
        %v366 = vpop.f32.mrf.mxu0
        %v367 = vadd.f32 0.0, %v366
        %368 = vmatmul.f32.gmra.mxu0 %v305
        %v369 = vpop.f32.mrf.mxu0
        %v370 = vadd.f32 0.0, %v369
        %371 = vmatmul.f32.gmra.mxu0 %v308
        %v372 = vpop.f32.mrf.mxu0
        %v373 = vadd.f32 0.0, %v372
        %374 = vmatmul.f32.gmra.mxu0 %v311
        %v375 = vpop.f32.mrf.mxu0
        %v376 = vadd.f32 0.0, %v375
        %377 = vmatmul.f32.gmra.mxu0 %v314
        %v378 = vpop.f32.mrf.mxu0
        %v379 = vadd.f32 0.0, %v378
        %380 = vmatmul.f32.gmra.mxu0 %v317
        %v381 = vpop.f32.mrf.mxu0
        %v382 = vadd.f32 0.0, %v381
        %383 = vmatmul.f32.gmra.mxu0 %v320
        %v384 = vpop.f32.mrf.mxu0
        %v385 = vadd.f32 0.0, %v384
        %386 = vmatmul.f32.gmra.mxu0 %v323
        %v387 = vpop.f32.mrf.mxu0
        %v388 = vadd.f32 0.0, %v387
        %389 = vmatmul.f32.gmra.mxu0 %v326
        %v390 = vpop.f32.mrf.mxu0
        %v391 = vadd.f32 0.0, %v390
        %392 = vmatmul.f32.gmra.mxu0 %v329
        %v393 = vpop.f32.mrf.mxu0
        %v394 = vadd.f32 0.0, %v393
        %395 = vmatmul.f32.gmra.mxu0 %v332
        %v396 = vpop.f32.mrf.mxu0
        %v397 = vadd.f32 0.0, %v396
        %398 = vmatmul.f32.gmra.mxu0 %v335
        %v399 = vpop.f32.mrf.mxu0
        %v400 = vadd.f32 0.0, %v399
        %401 = vmatmul.f32.gmra.mxu0 %v338
        %v402 = vpop.f32.mrf.mxu0
        %v403 = vadd.f32 0.0, %v402
        %404 = vmatmul.f32.gmra.mxu0 %v341
        %v405 = vpop.f32.mrf.mxu0
        %v406 = vadd.f32 0.0, %v405
        %407 = vdwg.mxu0
        %v408 = vld [vmem:[%s273] sm:$0xff]
        %v409 = vld [vmem:[%s273 + $0x8] sm:$0xff]
        %v410 = vld [vmem:[%s273 + $0x10] sm:$0xff]
        %v411 = vld [vmem:[%s273 + $0x18] sm:$0xff]
        %v412 = vld [vmem:[%s273 + $0x20] sm:$0xff]
        %v413 = vld [vmem:[%s273 + $0x28] sm:$0xff]
        %v414 = vld [vmem:[%s273 + $0x30] sm:$0xff]
        %v415 = vld [vmem:[%s273 + $0x38] sm:$0xff]
        %v416 = vld [vmem:[%s273 + $0x40] sm:$0xff]
        %v417 = vld [vmem:[%s273 + $0x48] sm:$0xff]
        %v418 = vld [vmem:[%s273 + $0x50] sm:$0xff]
        %v419 = vld [vmem:[%s273 + $0x58] sm:$0xff]
        %v420 = vld [vmem:[%s273 + $0x60] sm:$0xff]
        %v421 = vld [vmem:[%s273 + $0x68] sm:$0xff]
        %v422 = vld [vmem:[%s273 + $0x70] sm:$0xff]
        %v423 = vld [vmem:[%s273 + $0x78] sm:$0xff]
        %425 = vset.pattern.permute.xlu0 0
        %426 = vperm.xlu0 %425, %v408
        %v427 = vpop.permute.xlu0 %426
        %430 = vset.pattern.permute.xlu0 0
        %431 = vperm.xlu0 %430, %v409
        %v432 = vpop.permute.xlu0 %431
        %435 = vset.pattern.permute.xlu0 0
        %436 = vperm.xlu0 %435, %v410
        %v437 = vpop.permute.xlu0 %436
        %440 = vset.pattern.permute.xlu0 0
        %441 = vperm.xlu0 %440, %v411
        %v442 = vpop.permute.xlu0 %441
        %445 = vset.pattern.permute.xlu0 0
        %446 = vperm.xlu0 %445, %v412
        %v447 = vpop.permute.xlu0 %446
        %450 = vset.pattern.permute.xlu0 0
        %451 = vperm.xlu0 %450, %v413
        %v452 = vpop.permute.xlu0 %451
        %455 = vset.pattern.permute.xlu0 0
        %456 = vperm.xlu0 %455, %v414
        %v457 = vpop.permute.xlu0 %456
        %460 = vset.pattern.permute.xlu0 0
        %461 = vperm.xlu0 %460, %v415
        %v462 = vpop.permute.xlu0 %461
        %465 = vset.pattern.permute.xlu0 0
        %466 = vperm.xlu0 %465, %v416
        %v467 = vpop.permute.xlu0 %466
        %470 = vset.pattern.permute.xlu0 0
        %471 = vperm.xlu0 %470, %v417
        %v472 = vpop.permute.xlu0 %471
        %475 = vset.pattern.permute.xlu0 0
        %476 = vperm.xlu0 %475, %v418
        %v477 = vpop.permute.xlu0 %476
        %480 = vset.pattern.permute.xlu0 0
        %481 = vperm.xlu0 %480, %v419
        %v482 = vpop.permute.xlu0 %481
        %485 = vset.pattern.permute.xlu0 0
        %486 = vperm.xlu0 %485, %v420
        %v487 = vpop.permute.xlu0 %486
        %490 = vset.pattern.permute.xlu0 0
        %491 = vperm.xlu0 %490, %v421
        %v492 = vpop.permute.xlu0 %491
        %495 = vset.pattern.permute.xlu0 0
        %496 = vperm.xlu0 %495, %v422
        %v497 = vpop.permute.xlu0 %496
        %500 = vset.pattern.permute.xlu0 0
        %501 = vperm.xlu0 %500, %v423
        %v502 = vpop.permute.xlu0 %501
        %v504 = vmin.f32 %v361, %v427
        %v505 = vmin.f32 %v364, %v432
        %v506 = vmin.f32 %v367, %v437
        %v507 = vmin.f32 %v370, %v442
        %v508 = vmin.f32 %v373, %v447
        %v509 = vmin.f32 %v376, %v452
        %v510 = vmin.f32 %v379, %v457
        %v511 = vmin.f32 %v382, %v462
        %v512 = vmin.f32 %v385, %v467
        %v513 = vmin.f32 %v388, %v472
        %v514 = vmin.f32 %v391, %v477
        %v515 = vmin.f32 %v394, %v482
        %v516 = vmin.f32 %v397, %v487
        %v517 = vmin.f32 %v400, %v492
        %v518 = vmin.f32 %v403, %v497
        %v519 = vmin.f32 %v406, %v502
        %v520 = vmul.f32 %v504, 1.442695
        %v521 = vpow.pop %v520
        %v522 = vmul.f32 %v505, 1.442695
        %v523 = vpow.pop %v522
        %v524 = vmul.f32 %v506, 1.442695
        %v525 = vpow.pop %v524
        %v526 = vmul.f32 %v507, 1.442695
        %v527 = vpow.pop %v526
        %v528 = vmul.f32 %v508, 1.442695
        %v529 = vpow.pop %v528
        %v530 = vmul.f32 %v509, 1.442695
        %v531 = vpow.pop %v530
        %v532 = vmul.f32 %v510, 1.442695
        %v533 = vpow.pop %v532
        %v534 = vmul.f32 %v511, 1.442695
        %v535 = vpow.pop %v534
        %v536 = vmul.f32 %v512, 1.442695
        %v537 = vpow.pop %v536
        %v538 = vmul.f32 %v513, 1.442695
        %v539 = vpow.pop %v538
        %v540 = vmul.f32 %v514, 1.442695
        %v541 = vpow.pop %v540
        %v542 = vmul.f32 %v515, 1.442695
        %v543 = vpow.pop %v542
        %v544 = vmul.f32 %v516, 1.442695
        %v545 = vpow.pop %v544
        %v546 = vmul.f32 %v517, 1.442695
        %v547 = vpow.pop %v546
        %v548 = vmul.f32 %v518, 1.442695
        %v549 = vpow.pop %v548
        %v550 = vmul.f32 %v519, 1.442695
        %v551 = vpow.pop %v550
        %552 = vst [vmem:[%s246] sm:$0xff] %v521
        %553 = vst [vmem:[%s246 + $0x8] sm:$0xff] %v523
        %554 = vst [vmem:[%s246 + $0x10] sm:$0xff] %v525
        %555 = vst [vmem:[%s246 + $0x18] sm:$0xff] %v527
        %556 = vst [vmem:[%s246 + $0x20] sm:$0xff] %v529
        %557 = vst [vmem:[%s246 + $0x28] sm:$0xff] %v531
        %558 = vst [vmem:[%s246 + $0x30] sm:$0xff] %v533
        %559 = vst [vmem:[%s246 + $0x38] sm:$0xff] %v535
        %560 = vst [vmem:[%s246 + $0x40] sm:$0xff] %v537
        %561 = vst [vmem:[%s246 + $0x48] sm:$0xff] %v539
        %562 = vst [vmem:[%s246 + $0x50] sm:$0xff] %v541
        %563 = vst [vmem:[%s246 + $0x58] sm:$0xff] %v543
        %564 = vst [vmem:[%s246 + $0x60] sm:$0xff] %v545
        %565 = vst [vmem:[%s246 + $0x68] sm:$0xff] %v547
        %566 = vst [vmem:[%s246 + $0x70] sm:$0xff] %v549
        %567 = vst [vmem:[%s246 + $0x78] sm:$0xff] %v551
        %s568 = sand.u32 %s132, 1
        %s569 = scalar_lea.sflag [#allocation3], %s568
        %s570 = sand.u32 %s132, 1
        %s571 = smul.addr %s570, 128
        %s572 = scalar_lea.vmem [#allocation2], %s571
        // Predicated region
        $region33: #{tpu_custom_call.1} parent=31 // pred_check
          %p573 = pneg %p142
        $region34: #{tpu_custom_call.1} parent=31 // pred_check_branch
          %575 = sbr.rel (%p573) target = $region36
        $region35: #{tpu_custom_call.1} parent=31 // pred_region
          %s576 = smul.u32 16, %s23
          %578 = vsyncadd %s569, 0
          %s579 = sadd.s32 %s24, %s576
          %s580 = smul.addr %s22, 16
          %s581 = sadd.s32 %s579, %s580
          %s582 = smul.addr %s581, 8
          %s583 = scalar_lea.hbm %s3, %s582
          %s584 = sshll.u32 %s572, 4
          %s585 = int_to_ptr.vmem [resolvable:$true] %s584
          %s586 = sshll.u32 %s583, 4
          %s587 = int_to_ptr.hbm [resolvable:$true] %s586
          %592 = dma.vmem_to_hbm [thread:$0]  %s585, 2048, %s587, %s569, 128, 128, 8
        $region36: #{tpu_custom_call.1} parent=31 // pred_fallthru
          _
      $region32: #{tpu_custom_call.1} parent=5 // pred_fallthru
        _
      %p593 = scmp.le.s32.totalorder 2, %s12
      // Predicated region
      $region37: #{tpu_custom_call.1} parent=5 // pred_check
        %p594 = pneg %p593
      $region38: #{tpu_custom_call.1} parent=5 // pred_check_branch
        %596 = sbr.rel (%p594) target = $region40
      $region39: #{tpu_custom_call.1} parent=5 // pred_region
        %s597 = ssub.s32 %s12, 2
        // Predicated region
        $region41: #{tpu_custom_call.1} parent=39 // pred_check
          %p598 = pneg %p148
        $region42: #{tpu_custom_call.1} parent=39 // pred_check_branch
          %600 = sbr.rel (%p598) target = $region44
        $region43: #{tpu_custom_call.1} parent=39 // pred_region
          %s601 = sand.u32 %s133, 1
          %s602 = scalar_lea.sflag [#allocation3], %s601
          %s603 = sand.u32 %s133, 1
          %s604 = smul.addr %s603, 128
          %s605 = scalar_lea.vmem [#allocation2], %s604
          %607 = dma.done %s602, 2048
        $region44: #{tpu_custom_call.1} parent=39 // pred_fallthru
          _
      $region40: #{tpu_custom_call.1} parent=5 // pred_fallthru
        _
    $region6: #{tpu_custom_call.1} parent=1 // loop_footer
      %s16 = sadd.s32 1, %s12
    $region7: #{tpu_custom_call.1} parent=1 // loop_footer_branch
      %11 = sbr.rel target = $region3
    $region8: #{tpu_custom_call.1} parent=1 // loop_exit
      _
    %608 = vsyncpa [#allocation3], 1
    %s609 = scalar_lea.sflag [#allocation3], 1
    %610 = vsyncpa %s609, 1

</llo_original>
